<compile_context>
chip_gen: v7x
topology: tpu7x:2x2x1
jax: 0.10.0
libtpu: 0.0.40
codegen_flags: <defaults>
</compile_context>

<pallas_src>
import functools

import jax
import jax.numpy as jnp
from jax.experimental import pallas as pl
from jax.experimental.pallas import tpu as pltpu

EPS = 1e-5
DROP_P = 0.5
# Keep-threshold on a uniform uint32 draw; clamped so DROP_P -> 0 never wraps to 0.
_KEEP_THRESH = min(int(round((1.0 - DROP_P) * (2 ** 32))), 2 ** 32 - 1)

_VMEM_LIMIT_BYTES = 48 * 1024 * 1024   # safe on v5e/v6e (128 MiB phys) & v7x (64 MiB)
_TILE_BUDGET_BYTES = 40 * 1024 * 1024  # headroom for compiler scratch / semaphores


def _disentangler_kernel(seed_ref, x_ref, w_ref, gb_ref, o_ref, *,
                         n_rows, d_out_total, tile_d, apply_dropout):
    j = pl.program_id(0)

    # ---- Linear: h = x @ W for this feature tile.
    # x_ref: (N, D_in); w_ref: (D_in, TILE_D) (pre-transposed in the wrapper).
    # Plain NN-layout matmul -> no in-kernel transpose; f32 accumulation on the MXU.
    # (Linear bias omitted: exactly cancelled by the batch-mean subtraction below.)
    h = jnp.dot(x_ref[...], w_ref[...], preferred_element_type=jnp.float32)

    # ---- BatchNorm1d (training mode: batch statistics, biased variance).
    # One-pass stats: var = E[h^2] - mean^2 (both reductions depend only on h).
    inv_n = 1.0 / n_rows
    s1 = jnp.sum(h, axis=0, keepdims=True)            # (1, TILE_D)
    s2 = jnp.sum(h * h, axis=0, keepdims=True)        # (1, TILE_D)
    mean = s1 * inv_n
    var = jnp.maximum(s2 * inv_n - mean * mean, 0.0)   # guard tiny negative
    gamma = gb_ref[0:1, :]
    beta = gb_ref[1:2, :]
    scale = gamma * jax.lax.rsqrt(var + EPS)           # fold gamma * inv_std
    shift = beta - mean * scale                        # fold beta - mean*scale
    # ---- affine + ReLU (single scale+shift per element)
    y = jnp.maximum(h * scale + shift, 0.0)

    # ---- Dropout (p=0.5, inverted scaling), counter-based hash PRNG.
    if apply_dropout:
        rows = jax.lax.broadcasted_iota(jnp.uint32, y.shape, 0)
        cols = jax.lax.broadcasted_iota(jnp.uint32, y.shape, 1)
        gcol = cols + jnp.uint32(tile_d) * j.astype(jnp.uint32)   # global feature col
        # NOTE: mask pattern would repeat if N * D_out >= 2^32 (never in practice).
        idx = rows * jnp.uint32(d_out_total) + gcol
        # Mix the seed multiplicatively so different seeds give independent streams.
        h32 = idx ^ (seed_ref[0].astype(jnp.uint32) * jnp.uint32(0x9E3779B9))
        # 32-bit integer finalizer (murmur-style avalanche).
        h32 = h32 ^ (h32 >> jnp.uint32(16))
        h32 = h32 * jnp.uint32(0x7FEB352D)
        h32 = h32 ^ (h32 >> jnp.uint32(15))
        h32 = h32 * jnp.uint32(0x846CA68B)
        h32 = h32 ^ (h32 >> jnp.uint32(16))
        keep = h32 < jnp.uint32(_KEEP_THRESH)
        y = jnp.where(keep, y * (1.0 / (1.0 - DROP_P)), 0.0)

    o_ref[...] = y.astype(o_ref.dtype)


def _pick_tile_d(n, d_in, d_out, w_itemsize, x_itemsize, budget_bytes):
    """Largest lane-dense tile that (a) fits the VMEM budget and (b) leaves
    >= 2 grid steps for D_out >= 256 so v7x megacore can split the grid."""
    cands = [c for c in (512, 384, 256, 128) if c <= d_out and d_out % c == 0]
    if not cands:
        # D_out < 128 or not a multiple of 128: single full-width tile
        # (masked stores; correct, just not lane-dense).
        return d_out

    def fits(c):
        x_bytes = n * d_in * x_itemsize          # resident x, single-buffered
        w_bytes = 2 * c * d_in * w_itemsize      # double-buffered W tile
        o_bytes = 2 * n * c * 4                  # double-buffered f32 output tile
        gb_bytes = 2 * 2 * c * 4                 # fused gamma/beta tile
        return x_bytes + w_bytes + o_bytes + gb_bytes <= budget_bytes

    for c in cands:
        if d_out >= 256 and d_out // c < 2:
            continue                              # keep >= 2 steps (v7x megacore)
        if fits(c):
            return c
    return cands[-1]                              # 128-wide fallback


def disentangler_forward(x, w, b, gamma, beta, *, seed=0, training=True,
                         tile_d=None, weights_in_bf16=False):
    """Forward pass of Disentangler.

    x: (N, D_in). w: (D_out, D_in) torch layout. b/gamma/beta: (D_out,).
    `b` is accepted for API parity but unused: with batch-statistic BatchNorm the
    Linear bias is subtracted back out by the mean, so it never affects the output.
    `weights_in_bf16=True` streams x/W as bf16 (f32 MXU accumulation) to halve the
    HBM weight traffic (small-N regime is weight-bandwidth bound).
    """
    del b  # mathematically cancelled by BN batch-mean subtraction
    N, D_in = x.shape
    D_out, D_in_w = w.shape
    assert D_in_w == D_in

    # Pre-transpose W once in the wrapper (torch (out,in) -> (in,out)) so the
    # kernel never has to transpose on the XLU. Callers that run this repeatedly
    # should store W pre-transposed and skip this copy.
    wt = jnp.transpose(w)
    x_in = x.astype(jnp.float32)
    if weights_in_bf16:
        wt = wt.astype(jnp.bfloat16)
        x_in = x_in.astype(jnp.bfloat16)
    else:
        wt = wt.astype(jnp.float32)
    w_itemsize = jnp.dtype(wt.dtype).itemsize
    x_itemsize = jnp.dtype(x_in.dtype).itemsize

    if tile_d is None:
        tile_d = _pick_tile_d(N, D_in, D_out, w_itemsize, x_itemsize,
                              _TILE_BUDGET_BYTES)
    assert D_out % tile_d == 0
    assert (tile_d % 128 == 0) or (tile_d == D_out)
    grid = (D_out // tile_d,)

    # Fuse gamma/beta into one operand -> one small DMA per grid step, not two.
    gb = jnp.stack([gamma.astype(jnp.float32), beta.astype(jnp.float32)], axis=0)
    seed_arr = jnp.asarray([seed], dtype=jnp.int32)

    kernel = functools.partial(
        _disentangler_kernel,
        n_rows=N, d_out_total=D_out, tile_d=tile_d, apply_dropout=training,
    )

    cost = pl.CostEstimate(
        flops=2 * N * D_in * D_out,
        transcendentals=0,
        bytes_accessed=(w_itemsize * D_in * D_out + x_itemsize * N * D_in
                        + 4 * N * D_out + 4 * 2 * D_out),
    )

    # NOTE: for tiny problems (e.g. N=8, D=128) the single-step grid is dominated
    # by per-call Pallas overhead; the Pallas path pays off once the weight stream
    # is large enough to be bandwidth-limited.
    return pl.pallas_call(
        kernel,
        out_shape=jax.ShapeDtypeStruct((N, D_out), jnp.float32),
        grid_spec=pltpu.PrefetchScalarGridSpec(
            num_scalar_prefetch=1,                 # seed -> SMEM
            grid=grid,
            in_specs=[
                # x resident; constant index_map -> single buffer (no re-DMA).
                pl.BlockSpec((N, D_in), lambda j, seed: (0, 0),
                             pipeline_mode=pl.Buffered(1)),
                # streamed weight tile in (in, out) layout, double-buffered.
                pl.BlockSpec((D_in, tile_d), lambda j, seed: (0, j)),
                # fused gamma/beta tile.
                pl.BlockSpec((2, tile_d), lambda j, seed: (0, j)),
            ],
            out_specs=pl.BlockSpec((N, tile_d), lambda j, seed: (0, j)),
        ),
        compiler_params=pltpu.CompilerParams(
            dimension_semantics=("parallel",),     # feature tiles are independent
            vmem_limit_bytes=_VMEM_LIMIT_BYTES,
        ),
        cost_estimate=cost,
    )(seed_arr, x_in, wt, gb)


def _reference_no_dropout(x, w, b, gamma, beta):
    h = x @ w.T + b   # bias included here; BN cancels it, kernel skips it
    mean = jnp.mean(h, axis=0, keepdims=True)
    var = jnp.mean((h - mean) ** 2, axis=0, keepdims=True)
    y = gamma * (h - mean) / jnp.sqrt(var + EPS) + beta
    return jnp.maximum(y, 0.0)


if __name__ == "__main__":
    # Shapes implied by the module: args.emb_dim = 128, small batch = 8.
    N, D = 8, 128
    key = jax.random.PRNGKey(0)
    kx, kw, kb = jax.random.split(key, 3)

    x = jax.random.normal(kx, (N, D), dtype=jnp.float32)
    bound = 1.0 / jnp.sqrt(jnp.float32(D))
    w = jax.random.uniform(kw, (D, D), jnp.float32, -bound, bound)   # (out, in)
    b = jax.random.uniform(kb, (D,), jnp.float32, -bound, bound)
    gamma = jnp.ones((D,), jnp.float32)    # BatchNorm1d default weight
    beta = jnp.zeros((D,), jnp.float32)    # BatchNorm1d default bias

    # Correctness of the linear + batchnorm + relu hot path (dropout off; the
    # torch dropout RNG stream cannot be reproduced bit-exactly anyway).
    out_nodrop = disentangler_forward(x, w, b, gamma, beta, training=False)
    jax.block_until_ready(out_nodrop)
    ref = _reference_no_dropout(x, w, b, gamma, beta)
    assert jnp.allclose(out_nodrop, ref, atol=1e-4, rtol=1e-4), "mismatch vs reference"

    # Full training-mode forward (deterministic hash-PRNG dropout).
    out = disentangler_forward(x, w, b, gamma, beta, seed=1234, training=True)
    jax.block_until_ready(out)
    assert out.shape == (N, D)
    assert bool(jnp.all(jnp.isfinite(out)))
    # Every surviving element must be exactly 2x the pre-dropout activation.
    kept = out != 0.0
    assert bool(jnp.all(jnp.where(kept, jnp.abs(out - 2.0 * out_nodrop), 0.0) < 1e-4))

    # bf16-weight streaming path (loose tolerance: halves HBM weight traffic).
    out_bf16 = disentangler_forward(x, w, b, gamma, beta, training=False,
                                    weights_in_bf16=True)
    jax.block_until_ready(out_bf16)
    assert bool(jnp.all(jnp.isfinite(out_bf16)))
    assert float(jnp.max(jnp.abs(out_bf16 - ref))) < 1e-1

    # Multi-tile grid (D_out=256 -> tile_d=128, 2 grid steps; exercises the
    # tiling / megacore-splittable path).
    D2 = 256
    kx2, kw2, kb2 = jax.random.split(jax.random.PRNGKey(1), 3)
    x2 = jax.random.normal(kx2, (N, D2), dtype=jnp.float32)
    bound2 = 1.0 / jnp.sqrt(jnp.float32(D2))
    w2 = jax.random.uniform(kw2, (D2, D2), jnp.float32, -bound2, bound2)
    b2 = jax.random.uniform(kb2, (D2,), jnp.float32, -bound2, bound2)
    g2 = jnp.ones((D2,), jnp.float32)
    bt2 = jnp.zeros((D2,), jnp.float32)
    out2 = disentangler_forward(x2, w2, b2, g2, bt2, training=False)
    jax.block_until_ready(out2)
    ref2 = _reference_no_dropout(x2, w2, b2, g2, bt2)
    assert jnp.allclose(out2, ref2, atol=1e-4, rtol=1e-4), "multi-tile mismatch"

    print("KERNEL_OK")
</pallas_src>

<mosaic_0001>
module attributes {stable_mosaic.version = 11 : i64} {
  func.func @_disentangler_kernel(%arg0: i32, %arg1: memref<1xi32, #tpu.memory_space<smem>>, %arg2: memref<8x128xf32, #tpu.memory_space<vmem>>, %arg3: memref<128x128xf32, #tpu.memory_space<vmem>>, %arg4: memref<2x128xf32, #tpu.memory_space<vmem>>, %arg5: memref<8x128xf32, #tpu.memory_space<vmem>>) attributes {dimension_semantics = [#tpu.dimension_semantics<parallel>], iteration_bounds = array<i64: 1>, scalar_prefetch = 1 : i64, scratch_operands = 0 : i64, tpu.core_type = #tpu.core_type<tc>, window_params = [{pipeline_mode = #tpu.pipeline_mode<synchronous>, transform_indices = @transform_0, window_bounds = array<i64: 8, 128>}, {transform_indices = @transform_1, window_bounds = array<i64: 128, 128>}, {transform_indices = @transform_2, window_bounds = array<i64: 2, 128>}, {transform_indices = @transform_3, window_bounds = array<i64: 8, 128>}]} {
    %c0 = arith.constant 0 : index
    %c0_0 = arith.constant 0 : index
    %0 = vector.load %arg2[%c0, %c0_0] : memref<8x128xf32, #tpu.memory_space<vmem>>, vector<8x128xf32>
    %c0_1 = arith.constant 0 : index
    %c0_2 = arith.constant 0 : index
    %1 = vector.load %arg3[%c0_1, %c0_2] : memref<128x128xf32, #tpu.memory_space<vmem>>, vector<128x128xf32>
    %cst = arith.constant dense<0.000000e+00> : vector<8x128xf32>
    %2 = tpu.matmul %0, %1, %cst {dimension_numbers = #tpu.dot_dimension_numbers<[1], [0], [0], [1], [0, 0, 1, 1], [], []>} : vector<8x128xf32>, vector<128x128xf32>, vector<8x128xf32> -> vector<8x128xf32>
    %cst_3 = arith.constant dense<0.000000e+00> : vector<128xf32>
    %3 = vector.multi_reduction <add>, %2, %cst_3 [0] : vector<8x128xf32> to vector<128xf32>
    %4 = vector.shape_cast %3 : vector<128xf32> to vector<1x128xf32>
    %5 = arith.mulf %2, %2 : vector<8x128xf32>
    %cst_4 = arith.constant dense<0.000000e+00> : vector<128xf32>
    %6 = vector.multi_reduction <add>, %5, %cst_4 [0] : vector<8x128xf32> to vector<128xf32>
    %7 = vector.shape_cast %6 : vector<128xf32> to vector<1x128xf32>
    %cst_5 = arith.constant 1.250000e-01 : f32
    %8 = vector.broadcast %cst_5 : f32 to vector<1x128xf32>
    %9 = arith.mulf %4, %8 : vector<1x128xf32>
    %cst_6 = arith.constant 1.250000e-01 : f32
    %10 = vector.broadcast %cst_6 : f32 to vector<1x128xf32>
    %11 = arith.mulf %7, %10 : vector<1x128xf32>
    %12 = arith.mulf %9, %9 : vector<1x128xf32>
    %13 = arith.subf %11, %12 : vector<1x128xf32>
    %cst_7 = arith.constant 0.000000e+00 : f32
    %14 = vector.broadcast %cst_7 : f32 to vector<1x128xf32>
    %15 = arith.maximumf %13, %14 : vector<1x128xf32>
    %c0_8 = arith.constant 0 : index
    %c0_9 = arith.constant 0 : index
    %16 = vector.load %arg4[%c0_8, %c0_9] : memref<2x128xf32, #tpu.memory_space<vmem>>, vector<1x128xf32>
    %c1 = arith.constant 1 : index
    %c0_10 = arith.constant 0 : index
    %17 = vector.load %arg4[%c1, %c0_10] : memref<2x128xf32, #tpu.memory_space<vmem>>, vector<1x128xf32>
    %cst_11 = arith.constant 9.99999974E-6 : f32
    %18 = vector.broadcast %cst_11 : f32 to vector<1x128xf32>
    %19 = arith.addf %15, %18 : vector<1x128xf32>
    %20 = math.rsqrt %19 : vector<1x128xf32>
    %21 = arith.mulf %16, %20 : vector<1x128xf32>
    %22 = arith.mulf %9, %21 : vector<1x128xf32>
    %23 = arith.subf %17, %22 : vector<1x128xf32>
    %24 = vector.broadcast %21 : vector<1x128xf32> to vector<8x128xf32>
    %25 = arith.mulf %2, %24 : vector<8x128xf32>
    %26 = vector.broadcast %23 : vector<1x128xf32> to vector<8x128xf32>
    %27 = arith.addf %25, %26 : vector<8x128xf32>
    %cst_12 = arith.constant 0.000000e+00 : f32
    %28 = vector.broadcast %cst_12 : f32 to vector<8x128xf32>
    %29 = arith.maximumf %27, %28 : vector<8x128xf32>
    %c0_13 = arith.constant 0 : index
    %c0_14 = arith.constant 0 : index
    %30 = vector.load %arg5[%c0_13, %c0_14] : memref<8x128xf32, #tpu.memory_space<vmem>>, vector<8x128xf32>
    tpu.vector_store %arg5[%c0_13, %c0_14], %29 {strides = array<i32>} : memref<8x128xf32, #tpu.memory_space<vmem>>, vector<8x128xf32>,
    return
  }
  func.func @transform_0(%arg0: i32, %arg1: memref<1xi32, #tpu.memory_space<smem>>) -> (i32, i32) {
    %c0_i32 = arith.constant 0 : i32
    %c0_i32_0 = arith.constant 0 : i32
    %c0_i32_1 = arith.constant 0 : i32
    return %c0_i32, %c0_i32_0 : i32, i32
  }
  func.func @transform_1(%arg0: i32, %arg1: memref<1xi32, #tpu.memory_space<smem>>) -> (i32, i32) {
    %c0_i32 = arith.constant 0 : i32
    %c0_i32_0 = arith.constant 0 : i32
    return %c0_i32, %arg0 : i32, i32
  }
  func.func @transform_2(%arg0: i32, %arg1: memref<1xi32, #tpu.memory_space<smem>>) -> (i32, i32) {
    %c0_i32 = arith.constant 0 : i32
    %c0_i32_0 = arith.constant 0 : i32
    return %c0_i32, %arg0 : i32, i32
  }
  func.func @transform_3(%arg0: i32, %arg1: memref<1xi32, #tpu.memory_space<smem>>) -> (i32, i32) {
    %c0_i32 = arith.constant 0 : i32
    %c0_i32_0 = arith.constant 0 : i32
    return %c0_i32, %arg0 : i32, i32
  }
}

</mosaic_0001>

<llo_original>
// kernel: tpu_custom_call.1
$region0: #{tpu_custom_call.1}
  #allocation0 [shape = 'u32[]', space=smem, size = 0x4, offset = 0x4, fixed_abs, tag = 'smem constant byte address 0x4 - core index']
  #allocation1 [shape = 'u32[144,128]{1,0:T(1,128)}', space=vmem, size = 0x12000, scoped, tag = 'internal scratch']
  #allocation2 [shape = 's32[1]{0}', space=sflag, size = 0x4, scoped, tag = 'scoped memory for tpu_custom_call.1']
  #allocation3 [shape = 's32[1]{0:T(128)S(6)}', space=smem, size = 0x200, scoped, tag = 'prefetched SMEM operand 0']
  %s0 = inlined_call_operand.<no memory space> [shape: s32[1], index: 0, kind: input, shape index: {}]
  %s1 = inlined_call_operand.hbm [shape: f32[8,128], index: 1, kind: input, shape index: {}]
  %s2 = inlined_call_operand.hbm [shape: f32[128,128], index: 2, kind: input, shape index: {}]
  %s3 = inlined_call_operand.vmem [shape: f32[2,128], index: 3, kind: input, shape index: {}]
  %s4 = inlined_call_operand.hbm [shape: f32[8,128], index: 4, kind: output, shape index: {}]
  %s5 = sld [smem:[#allocation0]]
  $region30: #{tpu_custom_call.1} parent=0
    _
  %s7 = ssub.s32 1, %s5
  %s8 = scalar_select 0, %s7, %s5
  %9 = sst [smem:[#allocation3]] %s0
  $region1: #{tpu_custom_call.1} parent=0
    #allocation4 [shape = 'u8[4096]{0}', space=vmem, size = 0x1000, scoped, tag = 'input window, operand 1, single buffered']
    #allocation5 [shape = 's32[1]{0}', space=sflag, size = 0x4, scoped, tag = 'scoped memory for tpu_custom_call.1']
    #allocation6 [shape = 's32[1]{0}', space=sflag, size = 0x4, scoped, tag = 'scoped memory for tpu_custom_call.1']
    #allocation7 [shape = 'u8[65536]{0}', space=vmem, size = 0x10000, scoped, tag = 'input window, operand 2, single buffered']
    #allocation8 [shape = 's32[1]{0}', space=sflag, size = 0x4, scoped, tag = 'scoped memory for tpu_custom_call.1']
    #allocation9 [shape = 'u8[4096]{0}', space=vmem, size = 0x1000, scoped, tag = 'output window, operand 0, single buffered']
    %10 = vsyncpa [#allocation5], 0
    %11 = vsyncpa [#allocation8], 0
    %12 = vsyncpa [#allocation6], 0
    // Predicated region
    $region2: #{tpu_custom_call.1} parent=1 // pred_check
      _
    $region3: #{tpu_custom_call.1} parent=1 // pred_check_branch
      %14 = sbr.rel (0) target = $region5
    $region4: #{tpu_custom_call.1} parent=1 // pred_region
      %s16 = ssub.s32 128, 128
      %17 = vsyncadd [#allocation5], %s16
      %s19 = sshll.u32 [#allocation4], 4
      %s20 = int_to_ptr.vmem [resolvable:$true] %s19
      %22 = dma.hbm_to_vmem [thread:$0]  %s1, 128, %s20, [#allocation5]
    $region5: #{tpu_custom_call.1} parent=1 // pred_fallthru
      _
    // Predicated region
    $region6: #{tpu_custom_call.1} parent=1 // pred_check
      _
    $region7: #{tpu_custom_call.1} parent=1 // pred_check_branch
      %24 = sbr.rel (0) target = $region9
    $region8: #{tpu_custom_call.1} parent=1 // pred_region
      %s26 = ssub.s32 2048, 2048
      %27 = vsyncadd [#allocation8], %s26
      %s28 = sshll.u32 [#allocation7], 4
      %s29 = int_to_ptr.vmem [resolvable:$true] %s28
      %34 = dma.hbm_to_vmem [thread:$0]  %s2, 2048, %s29, [#allocation8], 128, 128, 8
    $region9: #{tpu_custom_call.1} parent=1 // pred_fallthru
      _
    // Predicated region
    $region10: #{tpu_custom_call.1} parent=1 // pred_check
      _
    $region11: #{tpu_custom_call.1} parent=1 // pred_check_branch
      %36 = sbr.rel (0) target = $region13
    $region12: #{tpu_custom_call.1} parent=1 // pred_region
      _
    $region13: #{tpu_custom_call.1} parent=1 // pred_fallthru
      _
    // Predicated region
    $region14: #{tpu_custom_call.1} parent=1 // pred_check
      _
    $region15: #{tpu_custom_call.1} parent=1 // pred_check_branch
      %38 = sbr.rel (0) target = $region17
    $region16: #{tpu_custom_call.1} parent=1 // pred_region
      %39 = dma.done [#allocation5], 128
    $region17: #{tpu_custom_call.1} parent=1 // pred_fallthru
      _
    // Predicated region
    $region18: #{tpu_custom_call.1} parent=1 // pred_check
      _
    $region19: #{tpu_custom_call.1} parent=1 // pred_check_branch
      %41 = sbr.rel (0) target = $region21
    $region20: #{tpu_custom_call.1} parent=1 // pred_region
      %42 = dma.done [#allocation8], 2048
    $region21: #{tpu_custom_call.1} parent=1 // pred_fallthru
      _
    %v43 = vld [vmem:[#allocation4] sm:$0xff]
    %v44 = vld [vmem:[#allocation7] sm:$0xff]
    %v45 = vld [vmem:[#allocation7 + $0x8] sm:$0xff]
    %v46 = vld [vmem:[#allocation7 + $0x10] sm:$0xff]
    %v47 = vld [vmem:[#allocation7 + $0x18] sm:$0xff]
    %v48 = vld [vmem:[#allocation7 + $0x20] sm:$0xff]
    %v49 = vld [vmem:[#allocation7 + $0x28] sm:$0xff]
    %v50 = vld [vmem:[#allocation7 + $0x30] sm:$0xff]
    %v51 = vld [vmem:[#allocation7 + $0x38] sm:$0xff]
    %v52 = vld [vmem:[#allocation7 + $0x40] sm:$0xff]
    %v53 = vld [vmem:[#allocation7 + $0x48] sm:$0xff]
    %v54 = vld [vmem:[#allocation7 + $0x50] sm:$0xff]
    %v55 = vld [vmem:[#allocation7 + $0x58] sm:$0xff]
    %v56 = vld [vmem:[#allocation7 + $0x60] sm:$0xff]
    %v57 = vld [vmem:[#allocation7 + $0x68] sm:$0xff]
    %v58 = vld [vmem:[#allocation7 + $0x70] sm:$0xff]
    %v59 = vld [vmem:[#allocation7 + $0x78] sm:$0xff]
    %60 = vmatprep.subr.mxu0 0.0
    %61 = vmatpush1.msra.mxu0 %v44
    %62 = vmatprep.subr.mxu0 0.0
    %63 = vmatpush1.msra.mxu0 %v45
    %64 = vmatprep.subr.mxu0 0.0
    %65 = vmatpush1.msra.mxu0 %v46
    %66 = vmatprep.subr.mxu0 0.0
    %67 = vmatpush1.msra.mxu0 %v47
    %68 = vmatprep.subr.mxu0 0.0
    %69 = vmatpush1.msra.mxu0 %v48
    %70 = vmatprep.subr.mxu0 0.0
    %71 = vmatpush1.msra.mxu0 %v49
    %72 = vmatprep.subr.mxu0 0.0
    %73 = vmatpush1.msra.mxu0 %v50
    %74 = vmatprep.subr.mxu0 0.0
    %75 = vmatpush1.msra.mxu0 %v51
    %76 = vmatprep.subr.mxu0 0.0
    %77 = vmatpush1.msra.mxu0 %v52
    %78 = vmatprep.subr.mxu0 0.0
    %79 = vmatpush1.msra.mxu0 %v53
    %80 = vmatprep.subr.mxu0 0.0
    %81 = vmatpush1.msra.mxu0 %v54
    %82 = vmatprep.subr.mxu0 0.0
    %83 = vmatpush1.msra.mxu0 %v55
    %84 = vmatprep.subr.mxu0 0.0
    %85 = vmatpush1.msra.mxu0 %v56
    %86 = vmatprep.subr.mxu0 0.0
    %87 = vmatpush1.msra.mxu0 %v57
    %88 = vmatprep.subr.mxu0 0.0
    %89 = vmatpush1.msra.mxu0 %v58
    %90 = vmatprep.subr.mxu0 0.0
    %91 = vmatpush1.msra.mxu0 %v59
    %92 = vmatprep.subr.mxu0 0.0
    %93 = vmatpush1.msra.mxu0 0.0
    %94 = vmatprep.subr.mxu0 0.0
    %95 = vmatpush1.msra.mxu0 0.0
    %96 = vmatprep.subr.mxu0 0.0
    %97 = vmatpush1.msra.mxu0 0.0
    %98 = vmatprep.subr.mxu0 0.0
    %99 = vmatpush1.msra.mxu0 0.0
    %100 = vmatprep.subr.mxu0 0.0
    %101 = vmatpush1.msra.mxu0 0.0
    %102 = vmatprep.subr.mxu0 0.0
    %103 = vmatpush1.msra.mxu0 0.0
    %104 = vmatprep.subr.mxu0 0.0
    %105 = vmatpush1.msra.mxu0 0.0
    %106 = vmatprep.subr.mxu0 0.0
    %107 = vmatpush1.msra.mxu0 0.0
    %108 = vmatprep.subr.mxu0 0.0
    %109 = vmatpush1.msra.mxu0 0.0
    %110 = vmatprep.subr.mxu0 0.0
    %111 = vmatpush1.msra.mxu0 0.0
    %112 = vmatprep.subr.mxu0 0.0
    %113 = vmatpush1.msra.mxu0 0.0
    %114 = vmatprep.subr.mxu0 0.0
    %115 = vmatpush1.msra.mxu0 0.0
    %116 = vmatprep.subr.mxu0 0.0
    %117 = vmatpush1.msra.mxu0 0.0
    %118 = vmatprep.subr.mxu0 0.0
    %119 = vmatpush1.msra.mxu0 0.0
    %120 = vmatprep.subr.mxu0 0.0
    %121 = vmatpush1.msra.mxu0 0.0
    %122 = vmatprep.subr.mxu0 0.0
    %123 = vmatpush1.msra.mxu0 0.0
    %124 = vmatprep.mubr.f32.mxu0 0.0
    %125 = vmatmul.mubr.f32.gmra.mrb[0].mxu0 %v43
    %v126 = vpop.f32.mrb[0].mxu0
    %v127 = vadd.f32 0.0, %v126
    %v128 = vpop.f32.mrb[0].mxu0
    %129 = vdwg.mxu0
    %v130 = vrot.slane %v127, 4
    %v131 = vadd.f32 %v127, %v130
    %v132 = vrot.slane %v131, 2
    %v133 = vadd.f32 %v131, %v132
    %v134 = vrot.slane %v133, 1
    %v135 = vadd.f32 %v133, %v134
    %v136 = vmul.f32 %v127, %v127
    %v137 = vrot.slane %v136, 4
    %v138 = vadd.f32 %v136, %v137
    %v139 = vrot.slane %v138, 2
    %v140 = vadd.f32 %v138, %v139
    %v141 = vrot.slane %v140, 1
    %v142 = vadd.f32 %v140, %v141
    %v143 = vmul.f32 %v135, 0.125
    %v144 = vmul.f32 %v142, 0.125
    %v145 = vmul.f32 %v143, %v143
    %v146 = vsub.f32 %v144, %v145
    %v147 = vmax.f32 %v146, 0.0
    %v148 = vld [vmem:[%s3] sm:$0x1]
    %v149 = vld [vmem:[%s3 + $0x1] sm:$0x1]
    %v150 = vadd.f32 %v147, 1e-05
    %v151 = vrsqrt.pop %v150
    %v152 = vmul.f32 %v148, %v151
    %v153 = vmul.f32 %v143, %v152
    %v154 = vsub.f32 %v149, %v153
    %v155 = vlaneseq
    %v156 = vshrl.u32 %v155, 7
    %v157 = vsub.s32 0, %v156
    %v158 = vrot.slane %v152, %v157
    %v159 = vmul.f32 %v127, %v158
    %v160 = vlaneseq
    %v161 = vshrl.u32 %v160, 7
    %v162 = vsub.s32 0, %v161
    %v163 = vrot.slane %v154, %v162
    %v164 = vadd.f32 %v159, %v163
    %v165 = vmax.f32 %v164, 0.0
    %166 = vst [vmem:[#allocation9] sm:$0xff] %v165
    // Predicated region
    $region22: #{tpu_custom_call.1} parent=1 // pred_check
      _
    $region23: #{tpu_custom_call.1} parent=1 // pred_check_branch
      %168 = sbr.rel (0) target = $region25
    $region24: #{tpu_custom_call.1} parent=1 // pred_region
      %s170 = ssub.s32 128, 128
      %171 = vsyncadd [#allocation6], %s170
      %s173 = sshll.u32 [#allocation9], 4
      %s174 = int_to_ptr.vmem [resolvable:$true] %s173
      %176 = dma.vmem_to_hbm [thread:$0]  %s174, 128, %s4, [#allocation6]
    $region25: #{tpu_custom_call.1} parent=1 // pred_fallthru
      _
    // Predicated region
    $region26: #{tpu_custom_call.1} parent=1 // pred_check
      _
    $region27: #{tpu_custom_call.1} parent=1 // pred_check_branch
      %178 = sbr.rel (0) target = $region29
    $region28: #{tpu_custom_call.1} parent=1 // pred_region
      %179 = dma.done [#allocation6], 128
    $region29: #{tpu_custom_call.1} parent=1 // pred_fallthru
      _
    %180 = vsyncpa [#allocation5], 1
    %181 = vsyncpa [#allocation8], 1
    %182 = vsyncpa [#allocation6], 1

</llo_original>
